<compile_context>
chip_gen: v7x
topology: tpu7x:2x2x1
jax: 0.10.0
libtpu: 0.0.40
codegen_flags: <defaults>
</compile_context>

<pallas_src>
import functools

import jax
import jax.numpy as jnp
from jax.experimental import pallas as pl
from jax.experimental.pallas import tpu as pltpu


def _round_up(n: int, m: int) -> int:
    return ((n + m - 1) // m) * m


def dqn_kernel(x_ref, w1_ref, b1_ref, w2_ref, b2_ref, w3_ref, b3_ref, out_ref):
    # Layer 1: (TB, S) @ (S, H) -> f32 acc, + bias, ReLU
    h1 = jnp.dot(x_ref[...], w1_ref[...], preferred_element_type=jnp.float32)
    h1 = jnp.maximum(h1 + b1_ref[...], 0.0)

    # Layer 2: (TB, H) @ (H, H) -> f32 acc, + bias, ReLU
    h2 = jnp.dot(h1.astype(jnp.bfloat16), w2_ref[...],
                 preferred_element_type=jnp.float32)
    h2 = jnp.maximum(h2 + b2_ref[...], 0.0)

    # Layer 3: (TB, H) @ (H, A_pad) -> f32 acc, + bias (lane-dense store)
    out = jnp.dot(h2.astype(jnp.bfloat16), w3_ref[...],
                  preferred_element_type=jnp.float32)
    out_ref[...] = (out + b3_ref[...]).astype(out_ref.dtype)


@functools.partial(jax.jit, static_argnames=("tile_b",))
def dqn_forward(x, params, *, tile_b: int = 256):
    """x: [B, state_size] float32. params: dict of w1,b1,w2,b2,w3,b3 (f32)."""
    B, S = x.shape
    H = params["w1"].shape[1]
    A = params["w3"].shape[1]

    # bf16 weights / activations for MXU throughput; f32 biases for the adds.
    w1 = params["w1"].astype(jnp.bfloat16)
    w2 = params["w2"].astype(jnp.bfloat16)
    b1 = params["b1"].astype(jnp.float32)
    b2 = params["b2"].astype(jnp.float32)

    # Lane-dense output: pad the action dim up to a multiple of 128.
    A_pad = _round_up(max(A, 128), 128)
    w3 = jnp.zeros((H, A_pad), jnp.bfloat16).at[:, :A].set(
        params["w3"].astype(jnp.bfloat16))
    b3 = jnp.zeros((1, A_pad), jnp.float32).at[:, :A].set(
        params["b3"].astype(jnp.float32))

    # Batch tiling: TB rows per grid step (multiple of 8 sublanes), pad B up.
    TB = min(tile_b, _round_up(B, 8))
    B_pad = _round_up(B, TB)
    x_p = jnp.zeros((B_pad, S), jnp.bfloat16).at[:B, :].set(
        x.astype(jnp.bfloat16))

    grid = (B_pad // TB,)

    flops = 2 * B_pad * (S * H + H * H + H * A_pad)
    bytes_accessed = (x_p.size * 2 + w1.size * 2 + w2.size * 2 + w3.size * 2
                      + b1.size * 4 + b2.size * 4 + b3.size * 4
                      + B_pad * A_pad * 4)

    out = pl.pallas_call(
        dqn_kernel,
        out_shape=jax.ShapeDtypeStruct((B_pad, A_pad), jnp.float32),
        grid=grid,
        in_specs=[
            pl.BlockSpec((TB, S), lambda i: (i, 0)),      # x: tiled over batch
            pl.BlockSpec((S, H), lambda i: (0, 0)),       # w1: VMEM-resident
            pl.BlockSpec((1, H), lambda i: (0, 0)),       # b1
            pl.BlockSpec((H, H), lambda i: (0, 0)),       # w2
            pl.BlockSpec((1, H), lambda i: (0, 0)),       # b2
            pl.BlockSpec((H, A_pad), lambda i: (0, 0)),   # w3 (padded)
            pl.BlockSpec((1, A_pad), lambda i: (0, 0)),   # b3 (padded)
        ],
        out_specs=pl.BlockSpec((TB, A_pad), lambda i: (i, 0)),
        compiler_params=pltpu.CompilerParams(
            dimension_semantics=("parallel",)),
        cost_estimate=pl.CostEstimate(
            flops=flops, transcendentals=0, bytes_accessed=bytes_accessed),
    )(x_p, w1, b1, w2, b2, w3, b3)

    return out[:B, :A]


def init_dqn_params(key, state_size, action_size, hidden_size=128):
    """Deterministic init mirroring nn.Linear's U(-1/sqrt(fan_in), 1/sqrt(fan_in)).

    Weights are stored transposed ([in, out]) relative to PyTorch so the kernel
    computes x @ W directly.
    """
    keys = jax.random.split(key, 6)

    def linear(kw, kb, fan_in, fan_out):
        bound = 1.0 / jnp.sqrt(jnp.float32(fan_in))
        w = jax.random.uniform(kw, (fan_in, fan_out), jnp.float32, -bound, bound)
        b = jax.random.uniform(kb, (1, fan_out), jnp.float32, -bound, bound)
        return w, b

    w1, b1 = linear(keys[0], keys[1], state_size, hidden_size)
    w2, b2 = linear(keys[2], keys[3], hidden_size, hidden_size)
    w3, b3 = linear(keys[4], keys[5], hidden_size, action_size)
    return {"w1": w1, "b1": b1, "w2": w2, "b2": b2, "w3": w3, "b3": b3}


if __name__ == "__main__":
    key = jax.random.PRNGKey(0)
    k_params, k_x = jax.random.split(key)

    batch = 8
    state_size = 16
    action_size = 8
    hidden_size = 128

    params = init_dqn_params(k_params, state_size, action_size, hidden_size)
    x = jax.random.normal(k_x, (batch, state_size), jnp.float32)

    out = dqn_forward(x, params)
    out = jax.block_until_ready(out)
    assert out.shape == (batch, action_size)

    # Reference 1: bf16-quantized inputs/weights with f32 accumulation
    # (mirrors the kernel's numerics) -> tight tolerance.
    xb = x.astype(jnp.bfloat16)
    w1b = params["w1"].astype(jnp.bfloat16)
    w2b = params["w2"].astype(jnp.bfloat16)
    w3b = params["w3"].astype(jnp.bfloat16)
    ref_bf16 = jnp.maximum(
        jnp.dot(xb, w1b, preferred_element_type=jnp.float32) + params["b1"], 0.0)
    ref_bf16 = jnp.maximum(
        jnp.dot(ref_bf16.astype(jnp.bfloat16), w2b,
                preferred_element_type=jnp.float32) + params["b2"], 0.0)
    ref_bf16 = jnp.dot(ref_bf16.astype(jnp.bfloat16), w3b,
                       preferred_element_type=jnp.float32) + params["b3"]
    assert jnp.allclose(out, ref_bf16, atol=2e-3, rtol=2e-3)

    # Reference 2: pure f32 math -> looser tolerance (bf16 quantization error).
    ref_f32 = jnp.maximum(x @ params["w1"] + params["b1"], 0.0)
    ref_f32 = jnp.maximum(ref_f32 @ params["w2"] + params["b2"], 0.0)
    ref_f32 = ref_f32 @ params["w3"] + params["b3"]
    assert jnp.allclose(out, ref_f32, atol=5e-2, rtol=5e-2)

    print("KERNEL_OK")
</pallas_src>

<mosaic_0001>
module attributes {stable_mosaic.version = 11 : i64} {
  func.func @dqn_kernel(%arg0: i32, %arg1: memref<8x16xbf16, #tpu.memory_space<vmem>>, %arg2: memref<16x128xbf16, #tpu.memory_space<vmem>>, %arg3: memref<1x128xf32, #tpu.memory_space<vmem>>, %arg4: memref<128x128xbf16, #tpu.memory_space<vmem>>, %arg5: memref<1x128xf32, #tpu.memory_space<vmem>>, %arg6: memref<128x128xbf16, #tpu.memory_space<vmem>>, %arg7: memref<1x128xf32, #tpu.memory_space<vmem>>, %arg8: memref<8x128xf32, #tpu.memory_space<vmem>>) attributes {dimension_semantics = [#tpu.dimension_semantics<parallel>], iteration_bounds = array<i64: 1>, scalar_prefetch = 0 : i64, scratch_operands = 0 : i64, tpu.core_type = #tpu.core_type<tc>, window_params = [{transform_indices = @transform_0, window_bounds = array<i64: 8, 16>}, {pipeline_mode = #tpu.pipeline_mode<synchronous>, transform_indices = @transform_1, window_bounds = array<i64: 16, 128>}, {pipeline_mode = #tpu.pipeline_mode<synchronous>, transform_indices = @transform_2, window_bounds = array<i64: 1, 128>}, {pipeline_mode = #tpu.pipeline_mode<synchronous>, transform_indices = @transform_3, window_bounds = array<i64: 128, 128>}, {pipeline_mode = #tpu.pipeline_mode<synchronous>, transform_indices = @transform_4, window_bounds = array<i64: 1, 128>}, {pipeline_mode = #tpu.pipeline_mode<synchronous>, transform_indices = @transform_5, window_bounds = array<i64: 128, 128>}, {pipeline_mode = #tpu.pipeline_mode<synchronous>, transform_indices = @transform_6, window_bounds = array<i64: 1, 128>}, {transform_indices = @transform_7, window_bounds = array<i64: 8, 128>}]} {
    %c0 = arith.constant 0 : index
    %c0_0 = arith.constant 0 : index
    %0 = vector.load %arg1[%c0, %c0_0] : memref<8x16xbf16, #tpu.memory_space<vmem>>, vector<8x16xbf16>
    %c0_1 = arith.constant 0 : index
    %c0_2 = arith.constant 0 : index
    %1 = vector.load %arg2[%c0_1, %c0_2] : memref<16x128xbf16, #tpu.memory_space<vmem>>, vector<16x128xbf16>
    %cst = arith.constant dense<0.000000e+00> : vector<8x128xf32>
    %2 = tpu.matmul %0, %1, %cst {dimension_numbers = #tpu.dot_dimension_numbers<[1], [0], [0], [1], [0, 0, 1, 1], [], []>} : vector<8x16xbf16>, vector<16x128xbf16>, vector<8x128xf32> -> vector<8x128xf32>
    %c0_3 = arith.constant 0 : index
    %c0_4 = arith.constant 0 : index
    %3 = vector.load %arg3[%c0_3, %c0_4] : memref<1x128xf32, #tpu.memory_space<vmem>>, vector<1x128xf32>
    %4 = vector.broadcast %3 : vector<1x128xf32> to vector<8x128xf32>
    %5 = arith.addf %2, %4 : vector<8x128xf32>
    %cst_5 = arith.constant 0.000000e+00 : f32
    %6 = vector.broadcast %cst_5 : f32 to vector<8x128xf32>
    %7 = arith.maximumf %5, %6 : vector<8x128xf32>
    %8 = arith.truncf %7 : vector<8x128xf32> to vector<8x128xbf16>
    %c0_6 = arith.constant 0 : index
    %c0_7 = arith.constant 0 : index
    %9 = vector.load %arg4[%c0_6, %c0_7] : memref<128x128xbf16, #tpu.memory_space<vmem>>, vector<128x128xbf16>
    %cst_8 = arith.constant dense<0.000000e+00> : vector<8x128xf32>
    %10 = tpu.matmul %8, %9, %cst_8 {dimension_numbers = #tpu.dot_dimension_numbers<[1], [0], [0], [1], [0, 0, 1, 1], [], []>} : vector<8x128xbf16>, vector<128x128xbf16>, vector<8x128xf32> -> vector<8x128xf32>
    %c0_9 = arith.constant 0 : index
    %c0_10 = arith.constant 0 : index
    %11 = vector.load %arg5[%c0_9, %c0_10] : memref<1x128xf32, #tpu.memory_space<vmem>>, vector<1x128xf32>
    %12 = vector.broadcast %11 : vector<1x128xf32> to vector<8x128xf32>
    %13 = arith.addf %10, %12 : vector<8x128xf32>
    %cst_11 = arith.constant 0.000000e+00 : f32
    %14 = vector.broadcast %cst_11 : f32 to vector<8x128xf32>
    %15 = arith.maximumf %13, %14 : vector<8x128xf32>
    %16 = arith.truncf %15 : vector<8x128xf32> to vector<8x128xbf16>
    %c0_12 = arith.constant 0 : index
    %c0_13 = arith.constant 0 : index
    %17 = vector.load %arg6[%c0_12, %c0_13] : memref<128x128xbf16, #tpu.memory_space<vmem>>, vector<128x128xbf16>
    %cst_14 = arith.constant dense<0.000000e+00> : vector<8x128xf32>
    %18 = tpu.matmul %16, %17, %cst_14 {dimension_numbers = #tpu.dot_dimension_numbers<[1], [0], [0], [1], [0, 0, 1, 1], [], []>} : vector<8x128xbf16>, vector<128x128xbf16>, vector<8x128xf32> -> vector<8x128xf32>
    %c0_15 = arith.constant 0 : index
    %c0_16 = arith.constant 0 : index
    %19 = vector.load %arg7[%c0_15, %c0_16] : memref<1x128xf32, #tpu.memory_space<vmem>>, vector<1x128xf32>
    %20 = vector.broadcast %19 : vector<1x128xf32> to vector<8x128xf32>
    %21 = arith.addf %18, %20 : vector<8x128xf32>
    %c0_17 = arith.constant 0 : index
    %c0_18 = arith.constant 0 : index
    %22 = vector.load %arg8[%c0_17, %c0_18] : memref<8x128xf32, #tpu.memory_space<vmem>>, vector<8x128xf32>
    tpu.vector_store %arg8[%c0_17, %c0_18], %21 {strides = array<i32>} : memref<8x128xf32, #tpu.memory_space<vmem>>, vector<8x128xf32>,
    return
  }
  func.func @transform_0(%arg0: i32) -> (i32, i32) {
    %c0_i32 = arith.constant 0 : i32
    %c0_i32_0 = arith.constant 0 : i32
    return %arg0, %c0_i32 : i32, i32
  }
  func.func @transform_1(%arg0: i32) -> (i32, i32) {
    %c0_i32 = arith.constant 0 : i32
    %c0_i32_0 = arith.constant 0 : i32
    %c0_i32_1 = arith.constant 0 : i32
    return %c0_i32, %c0_i32_0 : i32, i32
  }
  func.func @transform_2(%arg0: i32) -> (i32, i32) {
    %c0_i32 = arith.constant 0 : i32
    %c0_i32_0 = arith.constant 0 : i32
    %c0_i32_1 = arith.constant 0 : i32
    return %c0_i32, %c0_i32_0 : i32, i32
  }
  func.func @transform_3(%arg0: i32) -> (i32, i32) {
    %c0_i32 = arith.constant 0 : i32
    %c0_i32_0 = arith.constant 0 : i32
    %c0_i32_1 = arith.constant 0 : i32
    return %c0_i32, %c0_i32_0 : i32, i32
  }
  func.func @transform_4(%arg0: i32) -> (i32, i32) {
    %c0_i32 = arith.constant 0 : i32
    %c0_i32_0 = arith.constant 0 : i32
    %c0_i32_1 = arith.constant 0 : i32
    return %c0_i32, %c0_i32_0 : i32, i32
  }
  func.func @transform_5(%arg0: i32) -> (i32, i32) {
    %c0_i32 = arith.constant 0 : i32
    %c0_i32_0 = arith.constant 0 : i32
    %c0_i32_1 = arith.constant 0 : i32
    return %c0_i32, %c0_i32_0 : i32, i32
  }
  func.func @transform_6(%arg0: i32) -> (i32, i32) {
    %c0_i32 = arith.constant 0 : i32
    %c0_i32_0 = arith.constant 0 : i32
    %c0_i32_1 = arith.constant 0 : i32
    return %c0_i32, %c0_i32_0 : i32, i32
  }
  func.func @transform_7(%arg0: i32) -> (i32, i32) {
    %c0_i32 = arith.constant 0 : i32
    %c0_i32_0 = arith.constant 0 : i32
    return %arg0, %c0_i32 : i32, i32
  }
}

</mosaic_0001>

<llo_original>
// kernel: dqn_forward.1
$region0: #{dqn_forward.1}
  #allocation0 [shape = 'u32[]', space=smem, size = 0x4, offset = 0x4, fixed_abs, tag = 'smem constant byte address 0x4 - core index']
  #allocation1 [shape = 'u32[144,128]{1,0:T(1,128)}', space=vmem, size = 0x12000, scoped, tag = 'internal scratch']
  %s0 = inlined_call_operand.vmem [shape: bf16[8,16], index: 0, kind: input, shape index: {}]
  %s1 = inlined_call_operand.vmem [shape: bf16[16,128], index: 1, kind: input, shape index: {}]
  %s2 = inlined_call_operand.vmem [shape: f32[1,128], index: 2, kind: input, shape index: {}]
  %s3 = inlined_call_operand.vmem [shape: bf16[128,128], index: 3, kind: input, shape index: {}]
  %s4 = inlined_call_operand.vmem [shape: f32[1,128], index: 4, kind: input, shape index: {}]
  %s5 = inlined_call_operand.vmem [shape: bf16[128,128], index: 5, kind: input, shape index: {}]
  %s6 = inlined_call_operand.vmem [shape: f32[1,128], index: 6, kind: input, shape index: {}]
  %s7 = inlined_call_operand.hbm [shape: f32[8,128], index: 7, kind: output, shape index: {}]
  %s8 = sld [smem:[#allocation0]]
  $region38: #{dqn_forward.1} parent=0
    _
  %s10 = ssub.s32 1, %s8
  %s11 = scalar_select 0, %s10, %s8
  $region1: #{dqn_forward.1} parent=0
    #allocation2 [shape = 'u8[4096]{0}', space=vmem, size = 0x1000, scoped, tag = 'output window, operand 0, single buffered']
    #allocation3 [shape = 's32[1]{0}', space=sflag, size = 0x4, scoped, tag = 'scoped memory for dqn_forward.1']
    %12 = vsyncpa [#allocation3], 0
    // Predicated region
    $region2: #{dqn_forward.1} parent=1 // pred_check
      _
    $region3: #{dqn_forward.1} parent=1 // pred_check_branch
      %14 = sbr.rel (0) target = $region5
    $region4: #{dqn_forward.1} parent=1 // pred_region
      _
    $region5: #{dqn_forward.1} parent=1 // pred_fallthru
      _
    // Predicated region
    $region6: #{dqn_forward.1} parent=1 // pred_check
      _
    $region7: #{dqn_forward.1} parent=1 // pred_check_branch
      %16 = sbr.rel (0) target = $region9
    $region8: #{dqn_forward.1} parent=1 // pred_region
      _
    $region9: #{dqn_forward.1} parent=1 // pred_fallthru
      _
    // Predicated region
    $region10: #{dqn_forward.1} parent=1 // pred_check
      _
    $region11: #{dqn_forward.1} parent=1 // pred_check_branch
      %18 = sbr.rel (0) target = $region13
    $region12: #{dqn_forward.1} parent=1 // pred_region
      _
    $region13: #{dqn_forward.1} parent=1 // pred_fallthru
      _
    // Predicated region
    $region14: #{dqn_forward.1} parent=1 // pred_check
      _
    $region15: #{dqn_forward.1} parent=1 // pred_check_branch
      %20 = sbr.rel (0) target = $region17
    $region16: #{dqn_forward.1} parent=1 // pred_region
      _
    $region17: #{dqn_forward.1} parent=1 // pred_fallthru
      _
    // Predicated region
    $region18: #{dqn_forward.1} parent=1 // pred_check
      _
    $region19: #{dqn_forward.1} parent=1 // pred_check_branch
      %22 = sbr.rel (0) target = $region21
    $region20: #{dqn_forward.1} parent=1 // pred_region
      _
    $region21: #{dqn_forward.1} parent=1 // pred_fallthru
      _
    // Predicated region
    $region22: #{dqn_forward.1} parent=1 // pred_check
      _
    $region23: #{dqn_forward.1} parent=1 // pred_check_branch
      %24 = sbr.rel (0) target = $region25
    $region24: #{dqn_forward.1} parent=1 // pred_region
      _
    $region25: #{dqn_forward.1} parent=1 // pred_fallthru
      _
    // Predicated region
    $region26: #{dqn_forward.1} parent=1 // pred_check
      _
    $region27: #{dqn_forward.1} parent=1 // pred_check_branch
      %26 = sbr.rel (0) target = $region29
    $region28: #{dqn_forward.1} parent=1 // pred_region
      _
    $region29: #{dqn_forward.1} parent=1 // pred_fallthru
      _
    %v28 = vld [vmem:[%s0] sm:$0xf]
    %v29 = vld [vmem:[%s1] sm:$0xf]
    %v30 = vld [vmem:[%s1 + $0x4] sm:$0xf]
    %v31 = vld [vmem:[%s2] sm:$0x1]
    %v33 = vlaneseq
    %v34 = vshrl.u32 %v33, 7
    %v35 = vsub.s32 0, %v34
    %v36 = vrot.slane %v31, %v35
    %v40 = vunpack.c.l.b16 %v29
    %v41 = vunpack.c.l.b16 %v30
    %v42 = vpack.c.b16 %v41, %v40
    %vm44 = vcmask 130048
    %v46 = vsel %vm44, %v28, 0
    %48 = vmatprep.subr.bf16.mxu0 0
    %49 = vmatpush1.bf16.msra.mxu0 %v42
    %50 = vmatprep.subr.bf16.mxu0 0
    %51 = vmatpush1.bf16.msra.mxu0 0
    %52 = vmatprep.subr.bf16.mxu0 0
    %53 = vmatpush1.bf16.msra.mxu0 0
    %54 = vmatprep.subr.bf16.mxu0 0
    %55 = vmatpush1.bf16.msra.mxu0 0
    %56 = vmatprep.subr.bf16.mxu0 0
    %57 = vmatpush1.bf16.msra.mxu0 0
    %58 = vmatprep.subr.bf16.mxu0 0
    %59 = vmatpush1.bf16.msra.mxu0 0
    %60 = vmatprep.subr.bf16.mxu0 0
    %61 = vmatpush1.bf16.msra.mxu0 0
    %62 = vmatprep.subr.bf16.mxu0 0
    %63 = vmatpush1.bf16.msra.mxu0 0
    %64 = vmatprep.subr.bf16.mxu0 0
    %65 = vmatpush1.bf16.msra.mxu0 0
    %66 = vmatprep.subr.bf16.mxu0 0
    %67 = vmatpush1.bf16.msra.mxu0 0
    %68 = vmatprep.subr.bf16.mxu0 0
    %69 = vmatpush1.bf16.msra.mxu0 0
    %70 = vmatprep.subr.bf16.mxu0 0
    %71 = vmatpush1.bf16.msra.mxu0 0
    %72 = vmatprep.subr.bf16.mxu0 0
    %73 = vmatpush1.bf16.msra.mxu0 0
    %74 = vmatprep.subr.bf16.mxu0 0
    %75 = vmatpush1.bf16.msra.mxu0 0
    %76 = vmatprep.subr.bf16.mxu0 0
    %77 = vmatpush1.bf16.msra.mxu0 0
    %78 = vmatprep.subr.bf16.mxu0 0
    %79 = vmatpush1.bf16.msra.mxu0 0
    %80 = vmatprep.mubr.bf16.mxu0 0
    %81 = vmatmul.mubr.bf16.gmra.mrb[0].mxu0 %v46
    %v82 = vpop.f32.mrb[0].mxu0
    %v83 = vadd.f32 %v36, %v82
    %v84 = vpop.f32.mrb[0].mxu0
    %v85 = vpop.f32.mrb[0].mxu0
    %v86 = vpop.f32.mrb[0].mxu0
    %87 = vdwg.mxu0
    %v88 = vmax.f32 %v83, 0.0
    %v89 = vpack.c.bf16 %v88, %v88
    %v90 = vld [vmem:[%s3] sm:$0xf]
    %v91 = vld [vmem:[%s3 + $0x4] sm:$0xf]
    %v92 = vld [vmem:[%s3 + $0x8] sm:$0xf]
    %v93 = vld [vmem:[%s3 + $0xc] sm:$0xf]
    %v94 = vld [vmem:[%s3 + $0x10] sm:$0xf]
    %v95 = vld [vmem:[%s3 + $0x14] sm:$0xf]
    %v96 = vld [vmem:[%s3 + $0x18] sm:$0xf]
    %v97 = vld [vmem:[%s3 + $0x1c] sm:$0xf]
    %v98 = vld [vmem:[%s3 + $0x20] sm:$0xf]
    %v99 = vld [vmem:[%s3 + $0x24] sm:$0xf]
    %v100 = vld [vmem:[%s3 + $0x28] sm:$0xf]
    %v101 = vld [vmem:[%s3 + $0x2c] sm:$0xf]
    %v102 = vld [vmem:[%s3 + $0x30] sm:$0xf]
    %v103 = vld [vmem:[%s3 + $0x34] sm:$0xf]
    %v104 = vld [vmem:[%s3 + $0x38] sm:$0xf]
    %v105 = vld [vmem:[%s3 + $0x3c] sm:$0xf]
    %v106 = vld [vmem:[%s4] sm:$0x1]
    %v108 = vlaneseq
    %v109 = vshrl.u32 %v108, 7
    %v110 = vsub.s32 0, %v109
    %v111 = vrot.slane %v106, %v110
    %v129 = vunpack.c.l.b16 %v90
    %v130 = vunpack.c.l.b16 %v91
    %v131 = vunpack.c.l.b16 %v92
    %v132 = vunpack.c.l.b16 %v93
    %v133 = vunpack.c.l.b16 %v94
    %v134 = vunpack.c.l.b16 %v95
    %v135 = vunpack.c.l.b16 %v96
    %v136 = vunpack.c.l.b16 %v97
    %v137 = vunpack.c.l.b16 %v98
    %v138 = vunpack.c.l.b16 %v99
    %v139 = vunpack.c.l.b16 %v100
    %v140 = vunpack.c.l.b16 %v101
    %v141 = vunpack.c.l.b16 %v102
    %v142 = vunpack.c.l.b16 %v103
    %v143 = vunpack.c.l.b16 %v104
    %v144 = vunpack.c.l.b16 %v105
    %v145 = vpack.c.b16 %v130, %v129
    %v146 = vpack.c.b16 %v132, %v131
    %v147 = vpack.c.b16 %v134, %v133
    %v148 = vpack.c.b16 %v136, %v135
    %v149 = vpack.c.b16 %v138, %v137
    %v150 = vpack.c.b16 %v140, %v139
    %v151 = vpack.c.b16 %v142, %v141
    %v152 = vpack.c.b16 %v144, %v143
    %161 = vmatprep.subr.bf16.mxu0 0
    %162 = vmatpush1.bf16.msra.mxu0 %v145
    %163 = vmatprep.subr.bf16.mxu0 0
    %164 = vmatpush1.bf16.msra.mxu0 %v146
    %165 = vmatprep.subr.bf16.mxu0 0
    %166 = vmatpush1.bf16.msra.mxu0 %v147
    %167 = vmatprep.subr.bf16.mxu0 0
    %168 = vmatpush1.bf16.msra.mxu0 %v148
    %169 = vmatprep.subr.bf16.mxu0 0
    %170 = vmatpush1.bf16.msra.mxu0 %v149
    %171 = vmatprep.subr.bf16.mxu0 0
    %172 = vmatpush1.bf16.msra.mxu0 %v150
    %173 = vmatprep.subr.bf16.mxu0 0
    %174 = vmatpush1.bf16.msra.mxu0 %v151
    %175 = vmatprep.subr.bf16.mxu0 0
    %176 = vmatpush1.bf16.msra.mxu0 %v152
    %177 = vmatprep.subr.bf16.mxu0 0
    %178 = vmatpush1.bf16.msra.mxu0 0
    %179 = vmatprep.subr.bf16.mxu0 0
    %180 = vmatpush1.bf16.msra.mxu0 0
    %181 = vmatprep.subr.bf16.mxu0 0
    %182 = vmatpush1.bf16.msra.mxu0 0
    %183 = vmatprep.subr.bf16.mxu0 0
    %184 = vmatpush1.bf16.msra.mxu0 0
    %185 = vmatprep.subr.bf16.mxu0 0
    %186 = vmatpush1.bf16.msra.mxu0 0
    %187 = vmatprep.subr.bf16.mxu0 0
    %188 = vmatpush1.bf16.msra.mxu0 0
    %189 = vmatprep.subr.bf16.mxu0 0
    %190 = vmatpush1.bf16.msra.mxu0 0
    %191 = vmatprep.subr.bf16.mxu0 0
    %192 = vmatpush1.bf16.msra.mxu0 0
    %193 = vmatprep.mubr.bf16.mxu0 0
    %194 = vmatmul.mubr.bf16.gmra.mrb[0].mxu0 %v89
    %v195 = vpop.f32.mrb[0].mxu0
    %v196 = vadd.f32 %v111, %v195
    %v197 = vpop.f32.mrb[0].mxu0
    %v198 = vpop.f32.mrb[0].mxu0
    %v199 = vpop.f32.mrb[0].mxu0
    %200 = vdwg.mxu0
    %v201 = vmax.f32 %v196, 0.0
    %v202 = vpack.c.bf16 %v201, %v201
    %v203 = vld [vmem:[%s5] sm:$0xf]
    %v204 = vld [vmem:[%s5 + $0x4] sm:$0xf]
    %v205 = vld [vmem:[%s5 + $0x8] sm:$0xf]
    %v206 = vld [vmem:[%s5 + $0xc] sm:$0xf]
    %v207 = vld [vmem:[%s5 + $0x10] sm:$0xf]
    %v208 = vld [vmem:[%s5 + $0x14] sm:$0xf]
    %v209 = vld [vmem:[%s5 + $0x18] sm:$0xf]
    %v210 = vld [vmem:[%s5 + $0x1c] sm:$0xf]
    %v211 = vld [vmem:[%s5 + $0x20] sm:$0xf]
    %v212 = vld [vmem:[%s5 + $0x24] sm:$0xf]
    %v213 = vld [vmem:[%s5 + $0x28] sm:$0xf]
    %v214 = vld [vmem:[%s5 + $0x2c] sm:$0xf]
    %v215 = vld [vmem:[%s5 + $0x30] sm:$0xf]
    %v216 = vld [vmem:[%s5 + $0x34] sm:$0xf]
    %v217 = vld [vmem:[%s5 + $0x38] sm:$0xf]
    %v218 = vld [vmem:[%s5 + $0x3c] sm:$0xf]
    %v219 = vld [vmem:[%s6] sm:$0x1]
    %v221 = vlaneseq
    %v222 = vshrl.u32 %v221, 7
    %v223 = vsub.s32 0, %v222
    %v224 = vrot.slane %v219, %v223
    %v242 = vunpack.c.l.b16 %v203
    %v243 = vunpack.c.l.b16 %v204
    %v244 = vunpack.c.l.b16 %v205
    %v245 = vunpack.c.l.b16 %v206
    %v246 = vunpack.c.l.b16 %v207
    %v247 = vunpack.c.l.b16 %v208
    %v248 = vunpack.c.l.b16 %v209
    %v249 = vunpack.c.l.b16 %v210
    %v250 = vunpack.c.l.b16 %v211
    %v251 = vunpack.c.l.b16 %v212
    %v252 = vunpack.c.l.b16 %v213
    %v253 = vunpack.c.l.b16 %v214
    %v254 = vunpack.c.l.b16 %v215
    %v255 = vunpack.c.l.b16 %v216
    %v256 = vunpack.c.l.b16 %v217
    %v257 = vunpack.c.l.b16 %v218
    %v258 = vpack.c.b16 %v243, %v242
    %v259 = vpack.c.b16 %v245, %v244
    %v260 = vpack.c.b16 %v247, %v246
    %v261 = vpack.c.b16 %v249, %v248
    %v262 = vpack.c.b16 %v251, %v250
    %v263 = vpack.c.b16 %v253, %v252
    %v264 = vpack.c.b16 %v255, %v254
    %v265 = vpack.c.b16 %v257, %v256
    %274 = vmatprep.subr.bf16.mxu0 0
    %275 = vmatpush1.bf16.msra.mxu0 %v258
    %276 = vmatprep.subr.bf16.mxu0 0
    %277 = vmatpush1.bf16.msra.mxu0 %v259
    %278 = vmatprep.subr.bf16.mxu0 0
    %279 = vmatpush1.bf16.msra.mxu0 %v260
    %280 = vmatprep.subr.bf16.mxu0 0
    %281 = vmatpush1.bf16.msra.mxu0 %v261
    %282 = vmatprep.subr.bf16.mxu0 0
    %283 = vmatpush1.bf16.msra.mxu0 %v262
    %284 = vmatprep.subr.bf16.mxu0 0
    %285 = vmatpush1.bf16.msra.mxu0 %v263
    %286 = vmatprep.subr.bf16.mxu0 0
    %287 = vmatpush1.bf16.msra.mxu0 %v264
    %288 = vmatprep.subr.bf16.mxu0 0
    %289 = vmatpush1.bf16.msra.mxu0 %v265
    %290 = vmatprep.subr.bf16.mxu0 0
    %291 = vmatpush1.bf16.msra.mxu0 0
    %292 = vmatprep.subr.bf16.mxu0 0
    %293 = vmatpush1.bf16.msra.mxu0 0
    %294 = vmatprep.subr.bf16.mxu0 0
    %295 = vmatpush1.bf16.msra.mxu0 0
    %296 = vmatprep.subr.bf16.mxu0 0
    %297 = vmatpush1.bf16.msra.mxu0 0
    %298 = vmatprep.subr.bf16.mxu0 0
    %299 = vmatpush1.bf16.msra.mxu0 0
    %300 = vmatprep.subr.bf16.mxu0 0
    %301 = vmatpush1.bf16.msra.mxu0 0
    %302 = vmatprep.subr.bf16.mxu0 0
    %303 = vmatpush1.bf16.msra.mxu0 0
    %304 = vmatprep.subr.bf16.mxu0 0
    %305 = vmatpush1.bf16.msra.mxu0 0
    %306 = vmatprep.mubr.bf16.mxu0 0
    %307 = vmatmul.mubr.bf16.gmra.mrb[0].mxu0 %v202
    %v308 = vpop.f32.mrb[0].mxu0
    %v309 = vadd.f32 %v224, %v308
    %v310 = vpop.f32.mrb[0].mxu0
    %v311 = vpop.f32.mrb[0].mxu0
    %v312 = vpop.f32.mrb[0].mxu0
    %313 = vdwg.mxu0
    %314 = vst [vmem:[#allocation2] sm:$0xff] %v309
    // Predicated region
    $region30: #{dqn_forward.1} parent=1 // pred_check
      _
    $region31: #{dqn_forward.1} parent=1 // pred_check_branch
      %316 = sbr.rel (0) target = $region33
    $region32: #{dqn_forward.1} parent=1 // pred_region
      %s318 = ssub.s32 128, 128
      %319 = vsyncadd [#allocation3], %s318
      %s321 = sshll.u32 [#allocation2], 4
      %s322 = int_to_ptr.vmem [resolvable:$true] %s321
      %324 = dma.vmem_to_hbm [thread:$0]  %s322, 128, %s7, [#allocation3]
    $region33: #{dqn_forward.1} parent=1 // pred_fallthru
      _
    // Predicated region
    $region34: #{dqn_forward.1} parent=1 // pred_check
      _
    $region35: #{dqn_forward.1} parent=1 // pred_check_branch
      %326 = sbr.rel (0) target = $region37
    $region36: #{dqn_forward.1} parent=1 // pred_region
      %327 = dma.done [#allocation3], 128
    $region37: #{dqn_forward.1} parent=1 // pred_fallthru
      _
    %328 = vsyncpa [#allocation3], 1

</llo_original>
